<compile_context>
chip_gen: v6e
topology: v6e:2x2x1
jax: 0.10.0
libtpu: 0.0.40
codegen_flags: <defaults>
</compile_context>

<pallas_src>
import functools

import jax
import jax.numpy as jnp
from jax import lax
from jax.experimental import pallas as pl
from jax.experimental.pallas import tpu as pltpu


def _sepconv_kernel(x_ref, dw_ref, pw_ref, o_ref, *, KH, KW, W):
    # x_ref : (1, Cin, H*W)     one batch element, spatial flattened onto lanes
    # dw_ref: (KH*KW, Cin, 1)   depthwise weights, one (Cin, 1) column per tap
    # pw_ref: (Cout, Cin)       pointwise (1x1 conv) weights
    # o_ref : (1, Cout, H*W)    full spatial grid; wrapper slices out the valid (Ho, Wo) window
    x = x_ref[0]                               # (Cin, HW)
    HW = x.shape[-1]

    # Depthwise conv (stride 1, VALID): out[c, p] = sum_t x[c, p + s_t] * dw[t, c],
    # with s_t = kh*W + kw. The shift is a lane rotation; wrapped-around lanes only land in
    # positions the wrapper slices away, so no edge masking is needed.
    acc = x * dw_ref[0]                        # tap (0, 0): shift 0
    for kh in range(KH):
        for kw in range(KW):
            t = kh * KW + kw
            if t == 0:
                continue
            s = kh * W + kw
            # shifted[p] = x[p + s]   (pltpu.roll follows jnp.roll semantics; use positive shift)
            shifted = pltpu.roll(x, shift=HW - s, axis=1)
            acc = acc + shifted * dw_ref[t]

    # Pointwise 1x1 conv on the MXU: (Cout, Cin) @ (Cin, HW) -> (Cout, HW); spatial on lanes,
    # so the store below is a lane-dense (256-wide) unmasked vst.
    out = jnp.dot(pw_ref[...], acc, preferred_element_type=jnp.float32)
    o_ref[0] = out.astype(o_ref.dtype)


def seperable_conv2d(x_nchw, dw_weight, pw_weight):
    """x_nchw: (N, Cin, H, W); dw_weight: (Cin, 1, KH, KW); pw_weight: (Cout, Cin, 1, 1)."""
    N, Cin, H, W = x_nchw.shape
    assert dw_weight.shape[0] == Cin and dw_weight.shape[1] == 1, "depthwise conv: groups == Cin"
    assert pw_weight.shape[1:] == (Cin, 1, 1), "pointwise conv must be 1x1, bias-free"
    KH, KW = dw_weight.shape[2], dw_weight.shape[3]
    Cout = pw_weight.shape[0]
    Ho, Wo = H - KH + 1, W - KW + 1            # stride 1, VALID padding (PyTorch defaults)
    HW = H * W

    # Free reshape of the activations (stays NCHW) + tiny weight reshuffles; no transposes of x.
    x_flat = x_nchw.reshape(N, Cin, HW)
    dw = jnp.transpose(dw_weight[:, 0, :, :], (1, 2, 0)).reshape(KH * KW, Cin)[:, :, None]
    pw = pw_weight[:, :, 0, 0]                 # (Cout, Cin)

    kernel = functools.partial(_sepconv_kernel, KH=KH, KW=KW, W=W)

    out_flat = pl.pallas_call(
        kernel,
        out_shape=jax.ShapeDtypeStruct((N, Cout, HW), x_nchw.dtype),
        grid_spec=pltpu.PrefetchScalarGridSpec(
            num_scalar_prefetch=0,
            grid=(N,),
            in_specs=[
                pl.BlockSpec((1, Cin, HW), lambda n: (n, 0, 0)),
                pl.BlockSpec((KH * KW, Cin, 1), lambda n: (0, 0, 0)),  # weights stay VMEM-resident
                pl.BlockSpec((Cout, Cin), lambda n: (0, 0)),           # weights stay VMEM-resident
            ],
            out_specs=pl.BlockSpec((1, Cout, HW), lambda n: (n, 0, 0)),
        ),
        compiler_params=pltpu.CompilerParams(
            dimension_semantics=("parallel",)),  # lets v7x spread the batch over its 2 TCs
    )(x_flat, dw, pw)

    # Kernel output covers the full H x W grid (lane-dense); keep the valid (Ho, Wo) window.
    return out_flat.reshape(N, Cout, H, W)[:, :, :Ho, :Wo]


def _reference(x_nchw, dw_weight, pw_weight):
    # Pure-JAX reference via lax.conv_general_dilated (NCHW/OIHW, same as PyTorch).
    Cin = x_nchw.shape[1]
    y = lax.conv_general_dilated(
        x_nchw, dw_weight, window_strides=(1, 1), padding='VALID',
        dimension_numbers=('NCHW', 'OIHW', 'NCHW'), feature_group_count=Cin)
    y = lax.conv_general_dilated(
        y, pw_weight, window_strides=(1, 1), padding='VALID',
        dimension_numbers=('NCHW', 'OIHW', 'NCHW'))
    return y


if __name__ == "__main__":
    # Module config: SeperableConv2d(input_channels=4, output_channels=8, kernel_size=3)
    N, Cin, H, W = 2, 4, 16, 16
    Cout, K = 8, 3

    key = jax.random.PRNGKey(0)
    kx, kdw, kpw = jax.random.split(key, 3)

    x = jax.random.normal(kx, (N, Cin, H, W), dtype=jnp.float32)
    # Deterministic parameter init (fan-in scaled normal, like PyTorch's default magnitude).
    dw_weight = jax.random.normal(kdw, (Cin, 1, K, K), dtype=jnp.float32) * (1.0 / (K * K)) ** 0.5
    pw_weight = jax.random.normal(kpw, (Cout, Cin, 1, 1), dtype=jnp.float32) * (1.0 / Cin) ** 0.5

    out = seperable_conv2d(x, dw_weight, pw_weight)
    out = jax.block_until_ready(out)

    ref = jax.block_until_ready(_reference(x, dw_weight, pw_weight))
    assert out.shape == (N, Cout, H - K + 1, W - K + 1)
    assert jnp.allclose(out, ref, atol=1e-4, rtol=1e-4)

    print("KERNEL_OK")
</pallas_src>

<mosaic_0001>
module attributes {stable_mosaic.version = 11 : i64} {
  func.func @_sepconv_kernel(%arg0: i32, %arg1: memref<1x4x256xf32, #tpu.memory_space<vmem>>, %arg2: memref<9x4x1xf32, #tpu.memory_space<vmem>>, %arg3: memref<8x4xf32, #tpu.memory_space<vmem>>, %arg4: memref<1x8x256xf32, #tpu.memory_space<vmem>>) attributes {dimension_semantics = [#tpu.dimension_semantics<parallel>], iteration_bounds = array<i64: 2>, scalar_prefetch = 0 : i64, scratch_operands = 0 : i64, tpu.core_type = #tpu.core_type<tc>, window_params = [{transform_indices = @transform_0, window_bounds = array<i64: 1, 4, 256>}, {pipeline_mode = #tpu.pipeline_mode<synchronous>, transform_indices = @transform_1, window_bounds = array<i64: 9, 4, 1>}, {pipeline_mode = #tpu.pipeline_mode<synchronous>, transform_indices = @transform_2, window_bounds = array<i64: 8, 4>}, {transform_indices = @transform_3, window_bounds = array<i64: 1, 8, 256>}]} {
    %c0 = arith.constant 0 : index
    %c0_0 = arith.constant 0 : index
    %c0_1 = arith.constant 0 : index
    %0 = vector.load %arg1[%c0, %c0_0, %c0_1] : memref<1x4x256xf32, #tpu.memory_space<vmem>>, vector<1x4x256xf32>
    %1 = vector.shape_cast %0 : vector<1x4x256xf32> to vector<4x256xf32>
    %c0_2 = arith.constant 0 : index
    %c0_3 = arith.constant 0 : index
    %c0_4 = arith.constant 0 : index
    %2 = vector.load %arg2[%c0_2, %c0_3, %c0_4] : memref<9x4x1xf32, #tpu.memory_space<vmem>>, vector<1x4x1xf32>
    %3 = vector.shape_cast %2 : vector<1x4x1xf32> to vector<4x1xf32>
    %4 = vector.broadcast %3 : vector<4x1xf32> to vector<4x256xf32>
    %5 = arith.mulf %1, %4 : vector<4x256xf32>
    %c255_i32 = arith.constant 255 : i32
    %6 = tpu.dynamic_rotate %1 by %c255_i32 dim 1 : vector<4x256xf32>, i32 -> vector<4x256xf32>
    %c1 = arith.constant 1 : index
    %c0_5 = arith.constant 0 : index
    %c0_6 = arith.constant 0 : index
    %7 = vector.load %arg2[%c1, %c0_5, %c0_6] : memref<9x4x1xf32, #tpu.memory_space<vmem>>, vector<1x4x1xf32>
    %8 = vector.shape_cast %7 : vector<1x4x1xf32> to vector<4x1xf32>
    %9 = vector.broadcast %8 : vector<4x1xf32> to vector<4x256xf32>
    %10 = arith.mulf %6, %9 : vector<4x256xf32>
    %11 = arith.addf %5, %10 : vector<4x256xf32>
    %c254_i32 = arith.constant 254 : i32
    %12 = tpu.dynamic_rotate %1 by %c254_i32 dim 1 : vector<4x256xf32>, i32 -> vector<4x256xf32>
    %c2 = arith.constant 2 : index
    %c0_7 = arith.constant 0 : index
    %c0_8 = arith.constant 0 : index
    %13 = vector.load %arg2[%c2, %c0_7, %c0_8] : memref<9x4x1xf32, #tpu.memory_space<vmem>>, vector<1x4x1xf32>
    %14 = vector.shape_cast %13 : vector<1x4x1xf32> to vector<4x1xf32>
    %15 = vector.broadcast %14 : vector<4x1xf32> to vector<4x256xf32>
    %16 = arith.mulf %12, %15 : vector<4x256xf32>
    %17 = arith.addf %11, %16 : vector<4x256xf32>
    %c240_i32 = arith.constant 240 : i32
    %18 = tpu.dynamic_rotate %1 by %c240_i32 dim 1 : vector<4x256xf32>, i32 -> vector<4x256xf32>
    %c3 = arith.constant 3 : index
    %c0_9 = arith.constant 0 : index
    %c0_10 = arith.constant 0 : index
    %19 = vector.load %arg2[%c3, %c0_9, %c0_10] : memref<9x4x1xf32, #tpu.memory_space<vmem>>, vector<1x4x1xf32>
    %20 = vector.shape_cast %19 : vector<1x4x1xf32> to vector<4x1xf32>
    %21 = vector.broadcast %20 : vector<4x1xf32> to vector<4x256xf32>
    %22 = arith.mulf %18, %21 : vector<4x256xf32>
    %23 = arith.addf %17, %22 : vector<4x256xf32>
    %c239_i32 = arith.constant 239 : i32
    %24 = tpu.dynamic_rotate %1 by %c239_i32 dim 1 : vector<4x256xf32>, i32 -> vector<4x256xf32>
    %c4 = arith.constant 4 : index
    %c0_11 = arith.constant 0 : index
    %c0_12 = arith.constant 0 : index
    %25 = vector.load %arg2[%c4, %c0_11, %c0_12] : memref<9x4x1xf32, #tpu.memory_space<vmem>>, vector<1x4x1xf32>
    %26 = vector.shape_cast %25 : vector<1x4x1xf32> to vector<4x1xf32>
    %27 = vector.broadcast %26 : vector<4x1xf32> to vector<4x256xf32>
    %28 = arith.mulf %24, %27 : vector<4x256xf32>
    %29 = arith.addf %23, %28 : vector<4x256xf32>
    %c238_i32 = arith.constant 238 : i32
    %30 = tpu.dynamic_rotate %1 by %c238_i32 dim 1 : vector<4x256xf32>, i32 -> vector<4x256xf32>
    %c5 = arith.constant 5 : index
    %c0_13 = arith.constant 0 : index
    %c0_14 = arith.constant 0 : index
    %31 = vector.load %arg2[%c5, %c0_13, %c0_14] : memref<9x4x1xf32, #tpu.memory_space<vmem>>, vector<1x4x1xf32>
    %32 = vector.shape_cast %31 : vector<1x4x1xf32> to vector<4x1xf32>
    %33 = vector.broadcast %32 : vector<4x1xf32> to vector<4x256xf32>
    %34 = arith.mulf %30, %33 : vector<4x256xf32>
    %35 = arith.addf %29, %34 : vector<4x256xf32>
    %c224_i32 = arith.constant 224 : i32
    %36 = tpu.dynamic_rotate %1 by %c224_i32 dim 1 : vector<4x256xf32>, i32 -> vector<4x256xf32>
    %c6 = arith.constant 6 : index
    %c0_15 = arith.constant 0 : index
    %c0_16 = arith.constant 0 : index
    %37 = vector.load %arg2[%c6, %c0_15, %c0_16] : memref<9x4x1xf32, #tpu.memory_space<vmem>>, vector<1x4x1xf32>
    %38 = vector.shape_cast %37 : vector<1x4x1xf32> to vector<4x1xf32>
    %39 = vector.broadcast %38 : vector<4x1xf32> to vector<4x256xf32>
    %40 = arith.mulf %36, %39 : vector<4x256xf32>
    %41 = arith.addf %35, %40 : vector<4x256xf32>
    %c223_i32 = arith.constant 223 : i32
    %42 = tpu.dynamic_rotate %1 by %c223_i32 dim 1 : vector<4x256xf32>, i32 -> vector<4x256xf32>
    %c7 = arith.constant 7 : index
    %c0_17 = arith.constant 0 : index
    %c0_18 = arith.constant 0 : index
    %43 = vector.load %arg2[%c7, %c0_17, %c0_18] : memref<9x4x1xf32, #tpu.memory_space<vmem>>, vector<1x4x1xf32>
    %44 = vector.shape_cast %43 : vector<1x4x1xf32> to vector<4x1xf32>
    %45 = vector.broadcast %44 : vector<4x1xf32> to vector<4x256xf32>
    %46 = arith.mulf %42, %45 : vector<4x256xf32>
    %47 = arith.addf %41, %46 : vector<4x256xf32>
    %c222_i32 = arith.constant 222 : i32
    %48 = tpu.dynamic_rotate %1 by %c222_i32 dim 1 : vector<4x256xf32>, i32 -> vector<4x256xf32>
    %c8 = arith.constant 8 : index
    %c0_19 = arith.constant 0 : index
    %c0_20 = arith.constant 0 : index
    %49 = vector.load %arg2[%c8, %c0_19, %c0_20] : memref<9x4x1xf32, #tpu.memory_space<vmem>>, vector<1x4x1xf32>
    %50 = vector.shape_cast %49 : vector<1x4x1xf32> to vector<4x1xf32>
    %51 = vector.broadcast %50 : vector<4x1xf32> to vector<4x256xf32>
    %52 = arith.mulf %48, %51 : vector<4x256xf32>
    %53 = arith.addf %47, %52 : vector<4x256xf32>
    %c0_21 = arith.constant 0 : index
    %c0_22 = arith.constant 0 : index
    %54 = vector.load %arg3[%c0_21, %c0_22] : memref<8x4xf32, #tpu.memory_space<vmem>>, vector<8x4xf32>
    %cst = arith.constant dense<0.000000e+00> : vector<8x256xf32>
    %55 = tpu.matmul %54, %53, %cst {dimension_numbers = #tpu.dot_dimension_numbers<[1], [0], [0], [1], [0, 0, 1, 1], [], []>} : vector<8x4xf32>, vector<4x256xf32>, vector<8x256xf32> -> vector<8x256xf32>
    %c0_23 = arith.constant 0 : index
    %c0_24 = arith.constant 0 : index
    %c0_25 = arith.constant 0 : index
    %56 = vector.load %arg4[%c0_23, %c0_24, %c0_25] : memref<1x8x256xf32, #tpu.memory_space<vmem>>, vector<1x8x256xf32>
    %57 = vector.shape_cast %56 : vector<1x8x256xf32> to vector<8x256xf32>
    %58 = vector.shape_cast %55 : vector<8x256xf32> to vector<1x8x256xf32>
    tpu.vector_store %arg4[%c0_23, %c0_24, %c0_25], %58 {strides = array<i32>} : memref<1x8x256xf32, #tpu.memory_space<vmem>>, vector<1x8x256xf32>,
    return
  }
  func.func @transform_0(%arg0: i32) -> (i32, i32, i32) {
    %c0_i32 = arith.constant 0 : i32
    %c0_i32_0 = arith.constant 0 : i32
    %c0_i32_1 = arith.constant 0 : i32
    return %arg0, %c0_i32, %c0_i32_0 : i32, i32, i32
  }
  func.func @transform_1(%arg0: i32) -> (i32, i32, i32) {
    %c0_i32 = arith.constant 0 : i32
    %c0_i32_0 = arith.constant 0 : i32
    %c0_i32_1 = arith.constant 0 : i32
    %c0_i32_2 = arith.constant 0 : i32
    return %c0_i32, %c0_i32_0, %c0_i32_1 : i32, i32, i32
  }
  func.func @transform_2(%arg0: i32) -> (i32, i32) {
    %c0_i32 = arith.constant 0 : i32
    %c0_i32_0 = arith.constant 0 : i32
    %c0_i32_1 = arith.constant 0 : i32
    return %c0_i32, %c0_i32_0 : i32, i32
  }
  func.func @transform_3(%arg0: i32) -> (i32, i32, i32) {
    %c0_i32 = arith.constant 0 : i32
    %c0_i32_0 = arith.constant 0 : i32
    %c0_i32_1 = arith.constant 0 : i32
    return %arg0, %c0_i32, %c0_i32_0 : i32, i32, i32
  }
}

</mosaic_0001>

<llo_original>
// kernel: tpu_custom_call.1
$region0: #{tpu_custom_call.1}
  #allocation0 [shape = 'u32[]', space=smem, size = 0x4, offset = 0x4, fixed_abs, tag = 'smem constant byte address 0x4 - core index']
  #allocation1 [shape = 'u32[144,128]{1,0:T(1,128)}', space=vmem, size = 0x12000, scoped, tag = 'internal scratch']
  %s0 = inlined_call_operand.vmem [shape: f32[2,4,256], index: 0, kind: input, shape index: {}]
  %s1 = inlined_call_operand.vmem [shape: f32[9,4,1], index: 1, kind: input, shape index: {}]
  %s2 = inlined_call_operand.vmem [shape: f32[8,4], index: 2, kind: input, shape index: {}]
  %s3 = inlined_call_operand.hbm [shape: f32[2,8,256], index: 3, kind: output, shape index: {}]
  %s4 = sld [smem:[#allocation0]]
  $region45: #{tpu_custom_call.1} parent=0
    _
  %s6 = ssub.s32 1, %s4
  %s7 = scalar_select 0, %s6, %s4
  $region1: #{tpu_custom_call.1} parent=0
    #allocation2 [shape = 'u8[16384]{0}', space=vmem, size = 0x4000, scoped, tag = 'output window, operand 0']
    #allocation3 [shape = 's32[2]{0}', space=sflag, size = 0x8, scoped, tag = 'scoped memory for tpu_custom_call.1']
    %8 = vsyncpa [#allocation3], 0
    %s9 = scalar_lea.sflag [#allocation3], 1
    %10 = vsyncpa %s9, 0
    loop: start=0, step=1, limit=4
    $region2: #{tpu_custom_call.1} parent=1 // loop_pre_header
      _
    $region3: #{tpu_custom_call.1} parent=1 // loop_header
      %s12 = sphi 0, %s16
      %p13 = scmp.ge.s32.totalorder %s12, 4
      %s22 = sphi 0, %s24
      %s25 = sphi 0, %s22
      %s26 = sphi 0, %s25
      %s42 = sphi 0, %s26
      %s46 = sphi 0, %s46
      %s48 = sphi 0, %s46
      %s49 = sphi 0, %s48
      %s63 = sphi 0, %s49
      %s67 = sphi 0, %s67
      %s69 = sphi 0, %s67
      %s70 = sphi 0, %s69
      %s84 = sphi 0, %s70
      %s90 = sphi 0, %s92
      %s93 = sphi 0, %s90
      %s94 = sphi 0, %s93
      %s110 = sphi 0, %s94
    $region4: #{tpu_custom_call.1} parent=1 // loop_header_branch
      %15 = sbr.rel (%p13) target = $region8
    $region5: #{tpu_custom_call.1} parent=1 // loop_body
      %s17 = ssub.s32 %s12, 1
      %s18 = ssub.s32 %s12, 2
      %s19 = sadd.s32 %s12, 1
      %s20 = ssub.s32 %s12, %s19
      %p21 = scmp.eq.s32.totalorder %s20, 0
      %s23 = sadd.s32 %s22, 1
      %s24 = scalar_select %p21, %s22, %s23
      %p27 = pneg %p21
      %p28 = scmp.eq.s32.totalorder %s12, 1
      %p29 = por %p27, %p28
      %p30 = scmp.ne.s32.totalorder %s22, %s25
      %p31 = scmp.eq.s32.totalorder %s12, 0
      %p32 = por %p30, %p31
      %p33 = scmp.ne.s32.totalorder %s22, %s25
      %p34 = scmp.eq.s32.totalorder %s17, 1
      %p35 = por %p33, %p34
      %p36 = scmp.ne.s32.totalorder %s25, %s26
      %p37 = scmp.eq.s32.totalorder %s17, 0
      %p38 = por %p36, %p37
      %p39 = scmp.ne.s32.totalorder %s25, %s26
      %p40 = scmp.eq.s32.totalorder %s18, 1
      %p41 = por %p39, %p40
      %p43 = scmp.ne.s32.totalorder %s26, %s42
      %p44 = scmp.eq.s32.totalorder %s18, 0
      %p45 = por %p43, %p44
      %s47 = sadd.s32 %s46, 1
      %p50 = scmp.eq.s32.totalorder %s12, 1
      %p51 = scmp.ne.s32.totalorder %s46, %s48
      %p52 = scmp.eq.s32.totalorder %s12, 0
      %p53 = por %p51, %p52
      %p54 = scmp.ne.s32.totalorder %s46, %s48
      %p55 = scmp.eq.s32.totalorder %s17, 1
      %p56 = por %p54, %p55
      %p57 = scmp.ne.s32.totalorder %s48, %s49
      %p58 = scmp.eq.s32.totalorder %s17, 0
      %p59 = por %p57, %p58
      %p60 = scmp.ne.s32.totalorder %s48, %s49
      %p61 = scmp.eq.s32.totalorder %s18, 1
      %p62 = por %p60, %p61
      %p64 = scmp.ne.s32.totalorder %s49, %s63
      %p65 = scmp.eq.s32.totalorder %s18, 0
      %p66 = por %p64, %p65
      %s68 = sadd.s32 %s67, 1
      %p71 = scmp.eq.s32.totalorder %s12, 1
      %p72 = scmp.ne.s32.totalorder %s67, %s69
      %p73 = scmp.eq.s32.totalorder %s12, 0
      %p74 = por %p72, %p73
      %p75 = scmp.ne.s32.totalorder %s67, %s69
      %p76 = scmp.eq.s32.totalorder %s17, 1
      %p77 = por %p75, %p76
      %p78 = scmp.ne.s32.totalorder %s69, %s70
      %p79 = scmp.eq.s32.totalorder %s17, 0
      %p80 = por %p78, %p79
      %p81 = scmp.ne.s32.totalorder %s69, %s70
      %p82 = scmp.eq.s32.totalorder %s18, 1
      %p83 = por %p81, %p82
      %p85 = scmp.ne.s32.totalorder %s70, %s84
      %p86 = scmp.eq.s32.totalorder %s18, 0
      %p87 = por %p85, %p86
      %s88 = ssub.s32 %s12, %s19
      %p89 = scmp.eq.s32.totalorder %s88, 0
      %s91 = sadd.s32 %s90, 1
      %s92 = scalar_select %p89, %s90, %s91
      %p95 = pneg %p89
      %p96 = scmp.eq.s32.totalorder %s12, 1
      %p97 = por %p95, %p96
      %p98 = scmp.ne.s32.totalorder %s90, %s93
      %p99 = scmp.eq.s32.totalorder %s12, 0
      %p100 = por %p98, %p99
      %p101 = scmp.ne.s32.totalorder %s90, %s93
      %p102 = scmp.eq.s32.totalorder %s17, 1
      %p103 = por %p101, %p102
      %p104 = scmp.ne.s32.totalorder %s93, %s94
      %p105 = scmp.eq.s32.totalorder %s17, 0
      %p106 = por %p104, %p105
      %p107 = scmp.ne.s32.totalorder %s93, %s94
      %p108 = scmp.eq.s32.totalorder %s18, 1
      %p109 = por %p107, %p108
      %p111 = scmp.ne.s32.totalorder %s94, %s110
      %p112 = scmp.eq.s32.totalorder %s18, 0
      %p113 = por %p111, %p112
      %p114 = scmp.le.s32.totalorder 1, %s12
      %p115 = scmp.lt.s32.totalorder %s12, 3
      %p116 = pnand %p114, %p115
      %p117 = pneg %p116
      // Predicated region
      $region9: #{tpu_custom_call.1} parent=5 // pred_check
        _
      $region10: #{tpu_custom_call.1} parent=5 // pred_check_branch
        %119 = sbr.rel (%p116) target = $region12
      $region11: #{tpu_custom_call.1} parent=5 // pred_region
        %s120 = ssub.s32 %s12, 1
        // Predicated region
        $region13: #{tpu_custom_call.1} parent=11 // pred_check
          %p121 = pneg %p59
        $region14: #{tpu_custom_call.1} parent=11 // pred_check_branch
          %123 = sbr.rel (%p121) target = $region16
        $region15: #{tpu_custom_call.1} parent=11 // pred_region
          _
        $region16: #{tpu_custom_call.1} parent=11 // pred_fallthru
          _
        // Predicated region
        $region17: #{tpu_custom_call.1} parent=11 // pred_check
          %p124 = pneg %p80
        $region18: #{tpu_custom_call.1} parent=11 // pred_check_branch
          %126 = sbr.rel (%p124) target = $region20
        $region19: #{tpu_custom_call.1} parent=11 // pred_region
          _
        $region20: #{tpu_custom_call.1} parent=11 // pred_fallthru
          _
      $region12: #{tpu_custom_call.1} parent=5 // pred_fallthru
        _
      %p127 = scmp.lt.s32.totalorder %s12, 2
      // Predicated region
      $region21: #{tpu_custom_call.1} parent=5 // pred_check
        %p128 = pneg %p127
      $region22: #{tpu_custom_call.1} parent=5 // pred_check_branch
        %130 = sbr.rel (%p128) target = $region24
      $region23: #{tpu_custom_call.1} parent=5 // pred_region
        // Predicated region
        $region25: #{tpu_custom_call.1} parent=23 // pred_check
          %p131 = pneg %p32
        $region26: #{tpu_custom_call.1} parent=23 // pred_check_branch
          %133 = sbr.rel (%p131) target = $region28
        $region27: #{tpu_custom_call.1} parent=23 // pred_region
          %p134 = scmp.lt.s32.totalorder %s12, 1
          %s135 = scalar_select %p134, %s12, 1
          %s136 = smul.addr %s135, 2
          %s137 = smul.addr %s136, 4
          %s138 = scalar_lea.vmem %s0, %s137
        $region28: #{tpu_custom_call.1} parent=23 // pred_fallthru
          _
      $region24: #{tpu_custom_call.1} parent=5 // pred_fallthru
        _
      %p139 = scmp.le.s32.totalorder 1, %s12
      %p140 = scmp.lt.s32.totalorder %s12, 3
      %p141 = pnand %p139, %p140
      %p142 = pneg %p141
      // Predicated region
      $region29: #{tpu_custom_call.1} parent=5 // pred_check
        _
      $region30: #{tpu_custom_call.1} parent=5 // pred_check_branch
        %144 = sbr.rel (%p141) target = $region32
      $region31: #{tpu_custom_call.1} parent=5 // pred_region
        %s145 = ssub.s32 %s12, 1
        %p146 = scmp.lt.s32.totalorder %s17, 1
        %s147 = scalar_select %p146, %s17, 1
        %s148 = smul.addr %s147, 2
        %s149 = smul.addr %s148, 4
        %s150 = scalar_lea.vmem %s0, %s149
        %p151 = pneg %p38
        %p152 = pneg %p35
        %p153 = pneg %p59
        %p154 = pneg %p56
        %p155 = pneg %p80
        %p156 = pneg %p77
        %p157 = pneg %p106
        %p158 = pneg %p103
        %s159 = sand.u32 %s93, 1
        %s160 = scalar_lea.sflag [#allocation3], %s159
        %s161 = sand.u32 %s93, 1
        %s162 = smul.addr %s161, 16
        %s163 = scalar_lea.vmem [#allocation2], %s162
        %p164 = scmp.lt.s32.totalorder %s17, 1
        %s165 = scalar_select %p164, %s17, 1
        %s166 = smul.addr %s165, 2
        %s167 = smul.addr %s166, 4
        %s168 = scalar_lea.vmem %s0, %s167
        %v169 = vld [vmem:[%s168] sm:$0xff]
        %v170 = vld [vmem:[%s1] sm:$0xf]
        %172 = vset.pattern.permute.xlu0 0
        %173 = vperm.xlu0 %172, %v170
        %v174 = vpop.permute.xlu0 %173
        %v176 = vunpack.c.l.s4 839922192
        %v177 = vunpack.c.0.s8 %v176
        %v178 = vlaneseq
        %v179 = vshrl.u32 %v178, 7
        %v180 = vsub.s32 %v177, %v179
        %v181 = vrot.slane %v174, %v180
        %v183 = vmul.f32 %v169, %v181
        %v185 = vcombine.high %v169, %v169
        %187 = vrot.lane.b32.xlu0 %v169, 127
        %v188 = vpop.permute.xlu0 %187
        %189 = vrot.lane.b32.xlu0 %v185, 127
        %v190 = vpop.permute.xlu0 %189
        %v191 = vlaneseq
        %v192 = vand.u32 %v191, 127
        %vm193 = vcmp.lt.s32.totalorder %v192, 127
        %v194 = vsel %vm193, %v188, %v190
        %v195 = vsel %vm193, %v190, %v188
        %s196 = scalar_lea.vmem %s1, 4
        %v197 = vld [vmem:[%s196] sm:$0xf]
        %199 = vset.pattern.permute.xlu0 0
        %200 = vperm.xlu0 %199, %v197
        %v201 = vpop.permute.xlu0 %200
        %v203 = vmul.f32 %v194, %v201
        %v204 = vmul.f32 %v195, %v201
        %v207 = vcombine.low %v203, %v204
        %v209 = vadd.f32 %v183, %v207
        %210 = vrot.lane.b32.xlu0 %v169, 126
        %v211 = vpop.permute.xlu0 %210
        %212 = vrot.lane.b32.xlu0 %v185, 126
        %v213 = vpop.permute.xlu0 %212
        %vm214 = vcmp.lt.s32.totalorder %v192, 126
        %v215 = vsel %vm214, %v211, %v213
        %v216 = vsel %vm214, %v213, %v211
        %s217 = scalar_lea.vmem %s1, 8
        %v218 = vld [vmem:[%s217] sm:$0xf]
        %220 = vset.pattern.permute.xlu0 0
        %221 = vperm.xlu0 %220, %v218
        %v222 = vpop.permute.xlu0 %221
        %v224 = vmul.f32 %v215, %v222
        %v225 = vmul.f32 %v216, %v222
        %v228 = vcombine.low %v224, %v225
        %v230 = vadd.f32 %v209, %v228
        %231 = vrot.lane.b32.xlu0 %v169, 112
        %v232 = vpop.permute.xlu0 %231
        %233 = vrot.lane.b32.xlu0 %v185, 112
        %v234 = vpop.permute.xlu0 %233
        %vm235 = vcmp.lt.s32.totalorder %v192, 112
        %v236 = vsel %vm235, %v232, %v234
        %v237 = vsel %vm235, %v234, %v232
        %s238 = scalar_lea.vmem %s1, 12
        %v239 = vld [vmem:[%s238] sm:$0xf]
        %241 = vset.pattern.permute.xlu0 0
        %242 = vperm.xlu0 %241, %v239
        %v243 = vpop.permute.xlu0 %242
        %v245 = vmul.f32 %v236, %v243
        %v246 = vmul.f32 %v237, %v243
        %v249 = vcombine.low %v245, %v246
        %v251 = vadd.f32 %v230, %v249
        %252 = vrot.lane.b32.xlu0 %v169, 111
        %v253 = vpop.permute.xlu0 %252
        %254 = vrot.lane.b32.xlu0 %v185, 111
        %v255 = vpop.permute.xlu0 %254
        %vm256 = vcmp.lt.s32.totalorder %v192, 111
        %v257 = vsel %vm256, %v253, %v255
        %v258 = vsel %vm256, %v255, %v253
        %s259 = scalar_lea.vmem %s1, 16
        %v260 = vld [vmem:[%s259] sm:$0xf]
        %262 = vset.pattern.permute.xlu0 0
        %263 = vperm.xlu0 %262, %v260
        %v264 = vpop.permute.xlu0 %263
        %v266 = vmul.f32 %v257, %v264
        %v267 = vmul.f32 %v258, %v264
        %v270 = vcombine.low %v266, %v267
        %v272 = vadd.f32 %v251, %v270
        %273 = vrot.lane.b32.xlu0 %v169, 110
        %v274 = vpop.permute.xlu0 %273
        %275 = vrot.lane.b32.xlu0 %v185, 110
        %v276 = vpop.permute.xlu0 %275
        %vm277 = vcmp.lt.s32.totalorder %v192, 110
        %v278 = vsel %vm277, %v274, %v276
        %v279 = vsel %vm277, %v276, %v274
        %s280 = scalar_lea.vmem %s1, 20
        %v281 = vld [vmem:[%s280] sm:$0xf]
        %283 = vset.pattern.permute.xlu0 0
        %284 = vperm.xlu0 %283, %v281
        %v285 = vpop.permute.xlu0 %284
        %v287 = vmul.f32 %v278, %v285
        %v288 = vmul.f32 %v279, %v285
        %v291 = vcombine.low %v287, %v288
        %v293 = vadd.f32 %v272, %v291
        %294 = vrot.lane.b32.xlu0 %v169, 96
        %v295 = vpop.permute.xlu0 %294
        %296 = vrot.lane.b32.xlu0 %v185, 96
        %v297 = vpop.permute.xlu0 %296
        %vm298 = vcmp.lt.s32.totalorder %v192, 96
        %v299 = vsel %vm298, %v295, %v297
        %v300 = vsel %vm298, %v297, %v295
        %s301 = scalar_lea.vmem %s1, 24
        %v302 = vld [vmem:[%s301] sm:$0xf]
        %304 = vset.pattern.permute.xlu0 0
        %305 = vperm.xlu0 %304, %v302
        %v306 = vpop.permute.xlu0 %305
        %v308 = vmul.f32 %v299, %v306
        %v309 = vmul.f32 %v300, %v306
        %v312 = vcombine.low %v308, %v309
        %v314 = vadd.f32 %v293, %v312
        %315 = vrot.lane.b32.xlu0 %v169, 95
        %v316 = vpop.permute.xlu0 %315
        %317 = vrot.lane.b32.xlu0 %v185, 95
        %v318 = vpop.permute.xlu0 %317
        %vm319 = vcmp.lt.s32.totalorder %v192, 95
        %v320 = vsel %vm319, %v316, %v318
        %v321 = vsel %vm319, %v318, %v316
        %s322 = scalar_lea.vmem %s1, 28
        %v323 = vld [vmem:[%s322] sm:$0xf]
        %325 = vset.pattern.permute.xlu0 0
        %326 = vperm.xlu0 %325, %v323
        %v327 = vpop.permute.xlu0 %326
        %v329 = vmul.f32 %v320, %v327
        %v330 = vmul.f32 %v321, %v327
        %v333 = vcombine.low %v329, %v330
        %v335 = vadd.f32 %v314, %v333
        %336 = vrot.lane.b32.xlu0 %v169, 94
        %v337 = vpop.permute.xlu0 %336
        %338 = vrot.lane.b32.xlu0 %v185, 94
        %v339 = vpop.permute.xlu0 %338
        %vm340 = vcmp.lt.s32.totalorder %v192, 94
        %v341 = vsel %vm340, %v337, %v339
        %v342 = vsel %vm340, %v339, %v337
        %s343 = scalar_lea.vmem %s1, 32
        %v344 = vld [vmem:[%s343] sm:$0xf]
        %346 = vset.pattern.permute.xlu0 0
        %347 = vperm.xlu0 %346, %v344
        %v348 = vpop.permute.xlu0 %347
        %v350 = vmul.f32 %v341, %v348
        %v351 = vmul.f32 %v342, %v348
        %v354 = vcombine.low %v350, %v351
        %v356 = vadd.f32 %v335, %v354
        %v357 = vld [vmem:[%s2] sm:$0xff]
        %v359 = vcombine.high %v356, %v356
        %vm360 = vcmask 31744
        %v362 = vsel %vm360, %v357, 0
        %vm364 = vcmask 1043456
        %v365 = vsel %vm364, %v356, 0
        %v367 = vsel %vm364, %v359, 0
        %369 = vmatprep.subr.mxu0 0.0
        %370 = vmatpush1.msra.mxu0 0.0
        %371 = vmatprep.subr.mxu0 0.0
        %372 = vmatpush1.msra.mxu0 0.0
        %373 = vmatprep.subr.mxu0 0.0
        %374 = vmatpush1.msra.mxu0 0.0
        %375 = vmatprep.subr.mxu0 0.0
        %376 = vmatpush1.msra.mxu0 0.0
        %377 = vmatprep.subr.mxu0 0.0
        %378 = vmatpush1.msra.mxu0 0.0
        %379 = vmatprep.subr.mxu0 0.0
        %380 = vmatpush1.msra.mxu0 0.0
        %381 = vmatprep.subr.mxu0 0.0
        %382 = vmatpush1.msra.mxu0 0.0
        %383 = vmatprep.subr.mxu0 0.0
        %384 = vmatpush1.msra.mxu0 0.0
        %385 = vmatprep.subr.mxu0 0.0
        %386 = vmatpush1.msra.mxu0 0.0
        %387 = vmatprep.subr.mxu0 0.0
        %388 = vmatpush1.msra.mxu0 0.0
        %389 = vmatprep.subr.mxu0 0.0
        %390 = vmatpush1.msra.mxu0 0.0
        %391 = vmatprep.subr.mxu0 0.0
        %392 = vmatpush1.msra.mxu0 0.0
        %393 = vmatprep.subr.mxu0 0.0
        %394 = vmatpush1.msra.mxu0 0.0
        %395 = vmatprep.subr.mxu0 0.0
        %396 = vmatpush1.msra.mxu0 0.0
        %397 = vmatprep.subr.mxu0 0.0
        %398 = vmatpush1.msra.mxu0 0.0
        %399 = vmatprep.subr.mxu0 %v367
        %400 = vmatpush1.msra.mxu0 %v365
        %401 = vmatprep.subr.mxu0 0.0
        %402 = vmatpush2.msra.mxu0 0.0
        %403 = vmatprep.subr.mxu0 0.0
        %404 = vmatpush2.msra.mxu0 0.0
        %405 = vmatprep.subr.mxu0 0.0
        %406 = vmatpush2.msra.mxu0 0.0
        %407 = vmatprep.subr.mxu0 0.0
        %408 = vmatpush2.msra.mxu0 0.0
        %409 = vmatprep.subr.mxu0 0.0
        %410 = vmatpush2.msra.mxu0 0.0
        %411 = vmatprep.subr.mxu0 0.0
        %412 = vmatpush2.msra.mxu0 0.0
        %413 = vmatprep.subr.mxu0 0.0
        %414 = vmatpush2.msra.mxu0 0.0
        %415 = vmatprep.subr.mxu0 0.0
        %416 = vmatpush2.msra.mxu0 0.0
        %417 = vmatprep.subr.mxu0 0.0
        %418 = vmatpush2.msra.mxu0 0.0
        %419 = vmatprep.subr.mxu0 0.0
        %420 = vmatpush2.msra.mxu0 0.0
        %421 = vmatprep.subr.mxu0 0.0
        %422 = vmatpush2.msra.mxu0 0.0
        %423 = vmatprep.subr.mxu0 0.0
        %424 = vmatpush2.msra.mxu0 0.0
        %425 = vmatprep.subr.mxu0 0.0
        %426 = vmatpush2.msra.mxu0 0.0
        %427 = vmatprep.subr.mxu0 0.0
        %428 = vmatpush2.msra.mxu0 0.0
        %429 = vmatprep.subr.mxu0 0.0
        %430 = vmatpush2.msra.mxu0 0.0
        %431 = vmatprep.subr.mxu0 0.0
        %432 = vmatpush2.msra.mxu0 0.0
        %433 = vmatprep.mubr.f32.mxu0 0.0
        %434 = vmatmul.mubr.f32.gmra.mxu0 %v362
        %v435 = vpop.f32.mrf.mxu0
        %v436 = vadd.f32 0.0, %v435
        %v437 = vpop.f32.mrf.mxu0
        %v438 = vadd.f32 0.0, %v437
        %439 = vdwg.mxu0
        %440 = vst [vmem:[%s163] sm:$0xff] %v436
        %441 = vst [vmem:[%s163 + $0x8] sm:$0xff] %v438
        %s442 = sand.u32 %s93, 1
        %s443 = scalar_lea.sflag [#allocation3], %s442
        %s444 = sand.u32 %s93, 1
        %s445 = smul.addr %s444, 16
        %s446 = scalar_lea.vmem [#allocation2], %s445
        // Predicated region
        $region33: #{tpu_custom_call.1} parent=31 // pred_check
          %p447 = pneg %p103
        $region34: #{tpu_custom_call.1} parent=31 // pred_check_branch
          %449 = sbr.rel (%p447) target = $region36
        $region35: #{tpu_custom_call.1} parent=31 // pred_region
          %s451 = ssub.s32 256, 256
          %452 = vsyncadd %s443, %s451
          %s453 = smul.addr %s17, 2
          %s454 = smul.addr %s453, 128
          %s455 = scalar_lea.hbm %s3, %s454
          %s457 = sshll.u32 %s446, 4
          %s458 = int_to_ptr.vmem [resolvable:$true] %s457
          %460 = dma.vmem_to_hbm [thread:$0]  %s458, 256, %s455, %s443
        $region36: #{tpu_custom_call.1} parent=31 // pred_fallthru
          _
      $region32: #{tpu_custom_call.1} parent=5 // pred_fallthru
        _
      %p461 = scmp.le.s32.totalorder 2, %s12
      // Predicated region
      $region37: #{tpu_custom_call.1} parent=5 // pred_check
        %p462 = pneg %p461
      $region38: #{tpu_custom_call.1} parent=5 // pred_check_branch
        %464 = sbr.rel (%p462) target = $region40
      $region39: #{tpu_custom_call.1} parent=5 // pred_region
        %s465 = ssub.s32 %s12, 2
        // Predicated region
        $region41: #{tpu_custom_call.1} parent=39 // pred_check
          %p466 = pneg %p109
        $region42: #{tpu_custom_call.1} parent=39 // pred_check_branch
          %468 = sbr.rel (%p466) target = $region44
        $region43: #{tpu_custom_call.1} parent=39 // pred_region
          %s469 = sand.u32 %s94, 1
          %s470 = scalar_lea.sflag [#allocation3], %s469
          %s471 = sand.u32 %s94, 1
          %s472 = smul.addr %s471, 16
          %s473 = scalar_lea.vmem [#allocation2], %s472
          %474 = dma.done %s470, 256
        $region44: #{tpu_custom_call.1} parent=39 // pred_fallthru
          _
      $region40: #{tpu_custom_call.1} parent=5 // pred_fallthru
        _
    $region6: #{tpu_custom_call.1} parent=1 // loop_footer
      %s16 = sadd.s32 1, %s12
    $region7: #{tpu_custom_call.1} parent=1 // loop_footer_branch
      %11 = sbr.rel target = $region3
    $region8: #{tpu_custom_call.1} parent=1 // loop_exit
      _
    %475 = vsyncpa [#allocation3], 1
    %s476 = scalar_lea.sflag [#allocation3], 1
    %477 = vsyncpa %s476, 1

</llo_original>
